<compile_context>
chip_gen: v6e
topology: v6e:2x2x1
jax: 0.10.0
libtpu: 0.0.40
codegen_flags: <defaults>
</compile_context>

<pallas_src>
import functools

import jax
import jax.numpy as jnp
from jax.experimental import pallas as pl
from jax.experimental.pallas import tpu as pltpu


def temporal_attention_kernel(x_ref, w1t_ref, p_ref, be_ref, ve_ref, o_ref,
                              *, b_blk, t):
    bt = b_blk * t
    x_slab = x_ref[...]                                   # (k, bt), native dtype

    # Stacked contractions over the big operand: two single MXU dots with
    # >=bt output lanes each; x is never touched by the VPU.
    lhs_slab = jnp.dot(w1t_ref[...], x_slab,
                       preferred_element_type=jnp.float32)          # (n, bt)
    rhs_slab = jnp.dot(p_ref[...], x_slab,
                       preferred_element_type=jnp.float32)          # (n, bt)

    # product for ALL batches in the block at once (contraction over n):
    # prod_full[b1*t+t1, b2*t+t2] = sum_n lhs[b1,t1,n] * rhs[b2,n,t2].
    # Only the block-diagonal (b1 == b2) t x t blocks are needed; the b_blk-fold
    # redundancy is cheap, well-shaped MXU work at these sizes (bt <= ~512) and
    # replaces b_blk tiny lane-sparse per-batch matmuls.
    prod_full = jax.lax.dot_general(
        lhs_slab, rhs_slab, (((0,), (0,)), ((), ())),
        preferred_element_type=jnp.float32)                          # (bt, bt)

    if b_blk == 1:
        prod_slab = prod_full                                        # (t, bt)
    else:
        # Compact the diagonal blocks into a (t, bt) slab with a mask +
        # leading-axis reduce (pure VPU; no per-batch slicing / masked stores).
        prod_resh = prod_full.reshape(b_blk, t, bt)
        col_b = jax.lax.broadcasted_iota(jnp.int32, (b_blk, bt), 1) // t
        row_b = jax.lax.broadcasted_iota(jnp.int32, (b_blk, bt), 0)
        mask = (col_b == row_b).astype(jnp.float32)                  # (b_blk, bt)
        prod_slab = jnp.sum(prod_resh * mask[:, None, :], axis=0)    # (t, bt)

    # Numerically stable sigmoid on the EUP (identical to 1/(1+exp(-z))).
    z = prod_slab + be_ref[...]
    sig = 0.5 * (jnp.tanh(0.5 * z) + 1.0)

    # One lane-dense MXU matmul applies Ve to the whole batch block.
    T = jnp.dot(ve_ref[...], sig, preferred_element_type=jnp.float32)  # (t, bt)

    # softmax over rows (torch softmax(dim=1) per batch); exp + reciprocal -> EUP.
    m = jnp.max(T, axis=0, keepdims=True)
    e = jnp.exp(T - m)
    s = jnp.sum(e, axis=0, keepdims=True)
    o_ref[...] = e * pl.reciprocal(s, approx=True)


def _choose_b_blk(b, n, k, t, x_itemsize, *,
                  lane_target=512, vmem_budget=6 << 20, max_b_blk=256):
    """Batches folded per grid step.

    Targets a lane-dense slab (b_blk*t >= lane_target; 512 lanes feeds the
    256-wide v6e/v7x MXU, 128 suffices on v5e), keeps >= 2 grid steps whenever
    b >= 2 (so the 'parallel' axis can shard across v7x's two TensorCores),
    and sizes the per-step working set against a conservative VMEM budget that
    reflects the lane-dense layout (no tile-padding undercount) and includes
    the double-buffered x/output blocks plus the (bt, bt) product temporary.
    """
    if b <= 1:
        b_blk = 1
    else:
        two_steps = -(-b // 2)                 # ceil(b/2): keep nb >= 2
        want = -(-lane_target // t)            # lane-density target
        b_blk = max(1, min(two_steps, want, max_b_blk, b))

    def working_set(bb):
        bt = bb * t
        return (2 * k * bt * x_itemsize        # double-buffered x slab
                + 2 * t * bt * 4               # double-buffered output slab
                + 2 * t * bt * 4               # double-buffered be slab
                + 2 * n * bt * 4               # lhs / rhs slabs
                + bt * bt * 4                  # (bt, bt) product temporary
                + 2 * 2 * n * k * x_itemsize)  # W1^T and P (double-buffered)

    while b_blk > 1 and working_set(b_blk) > vmem_budget:
        b_blk -= 1
    return int(b_blk)


def temporal_attention(x, U1, U2, U3, be, Ve, *, b_blk=None):
    b, n, c, t = x.shape
    k = n * c
    f32 = jnp.float32

    if b_blk is None:
        b_blk = _choose_b_blk(b, n, k, t, jnp.dtype(x.dtype).itemsize)
    nb = pl.cdiv(b, b_blk)
    b_pad = nb * b_blk
    bt = b_blk * t

    # Free wrapper-side layout plumbing: merge (n, c) -> k and fold the batch
    # block into the lane axis so the kernel sees a lane-dense (k, bt) slab.
    # x keeps its native dtype (bf16 feeds the MXU directly, no in-kernel cast).
    xr = x.reshape(b, k, t)
    if b_pad != b:
        xr = jnp.pad(xr, ((0, b_pad - b), (0, 0), (0, 0)))
    x_slab = xr.reshape(nb, b_blk, k, t).transpose(0, 2, 1, 3).reshape(nb, k, bt)

    U1f, U2f, U3f = U1.astype(f32), U2.astype(f32), U3.astype(f32)
    # W1^T[m, (n',c)] = U1[n'] * U2[c, m]
    w1t = (U1f[:, None, None] * U2f[None, :, :]).reshape(k, n).T
    # P[m, (n',c)] = delta(m, n') * U3[c]  -> rhs_slab = P @ x_slab (single MXU dot).
    # NOTE: for very large num_of_vertices, P (n x n*c) gets big/sparse; fold U3
    # with a grouped reduction (or a pre-scaled x) instead of materialising P.
    p = jnp.kron(jnp.eye(n, dtype=f32), U3f[None, :])
    # Tiny folded weights are cast to x's dtype so the big slab is not cast
    # in-kernel (bf16 MXU path on v6e/v7x, no VPU cast pass on v5e).
    w1t = w1t.astype(x.dtype)
    p = p.astype(x.dtype)

    be_slab = jnp.tile(be.reshape(t, t).astype(f32), (1, b_blk))      # (t, bt)
    vef = Ve.astype(f32)

    grid_spec = pltpu.PrefetchScalarGridSpec(
        num_scalar_prefetch=0,
        grid=(nb,),
        in_specs=[
            pl.BlockSpec((pl.Squeezed(), k, bt), lambda i: (i, 0, 0)),  # x slab
            pl.BlockSpec((n, k), lambda i: (0, 0)),                     # W1^T
            pl.BlockSpec((n, k), lambda i: (0, 0)),                     # P
            pl.BlockSpec((t, bt), lambda i: (0, 0)),                    # be (tiled)
            pl.BlockSpec((t, t), lambda i: (0, 0)),                     # Ve
        ],
        # Lane-dense output slab: last dim bt per grid step.
        out_specs=pl.BlockSpec((pl.Squeezed(), t, bt), lambda i: (i, 0, 0)),
    )

    kernel = functools.partial(temporal_attention_kernel, b_blk=b_blk, t=t)

    out = pl.pallas_call(
        kernel,
        out_shape=jax.ShapeDtypeStruct((nb, t, bt), f32),
        grid_spec=grid_spec,
        compiler_params=pltpu.CompilerParams(
            dimension_semantics=("parallel",),
            vmem_limit_bytes=32 * 1024 * 1024),
    )(x_slab, w1t, p, be_slab, vef)

    # (nb, t, bt) -> (b, t, t): columns inside a block are stacked batch-major.
    out = out.reshape(nb, t, b_blk, t).transpose(0, 2, 1, 3).reshape(b_pad, t, t)
    return out[:b]


def temporal_attention_ref(x, U1, U2, U3, be, Ve):
    # Pure-JAX reference mirroring the PyTorch forward exactly.
    lhs = jnp.matmul(jnp.matmul(jnp.transpose(x, (0, 3, 2, 1)), U1), U2)   # (b, t, n)
    rhs = jnp.einsum('c,bnct->bnt', U3, x)                                  # (b, n, t)
    product = jnp.matmul(lhs, rhs)                                          # (b, t, t)
    T = jnp.matmul(Ve, jax.nn.sigmoid(product + be))                        # (b, t, t)
    return jax.nn.softmax(T, axis=1)


if __name__ == "__main__":
    # Small shapes: batch=2, num_of_vertices=16, in_channels=4, in_seq_length=8
    b, n, c, t = 2, 16, 4, 8

    key = jax.random.PRNGKey(0)
    kx, k1, k2, k3, kb, kv = jax.random.split(key, 6)

    x = jax.random.normal(kx, (b, n, c, t), dtype=jnp.float32)
    U1 = jax.random.normal(k1, (n,), dtype=jnp.float32) * 0.1
    U2 = jax.random.normal(k2, (c, n), dtype=jnp.float32) * 0.1
    U3 = jax.random.normal(k3, (c,), dtype=jnp.float32) * 0.1
    be = jax.random.normal(kb, (1, t, t), dtype=jnp.float32) * 0.1
    Ve = jax.random.normal(kv, (t, t), dtype=jnp.float32) * 0.1

    ref = temporal_attention_ref(x, U1, U2, U3, be, Ve)

    # Default heuristic path (b_blk=1, nb=2 grid steps -> both v7x TensorCores).
    out = jax.block_until_ready(temporal_attention(x, U1, U2, U3, U3 * 0 + be if False else be, Ve))
    assert out.shape == (b, t, t)
    assert jnp.allclose(out, ref, atol=1e-3, rtol=1e-3), (
        f"mismatch (default b_blk): max abs err {jnp.max(jnp.abs(out - ref))}")

    # Forced multi-batch block (exercises the stacked/mask-reduce path).
    out2 = jax.block_until_ready(temporal_attention(x, U1, U2, U3, be, Ve, b_blk=2))
    assert out2.shape == (b, t, t)
    assert jnp.allclose(out2, ref, atol=1e-3, rtol=1e-3), (
        f"mismatch (b_blk=2): max abs err {jnp.max(jnp.abs(out2 - ref))}")

    print("KERNEL_OK")
</pallas_src>

<mosaic_0001>
module attributes {stable_mosaic.version = 11 : i64} {
  func.func @temporal_attention_kernel(%arg0: i32, %arg1: memref<1x64x8xf32, #tpu.memory_space<vmem>>, %arg2: memref<16x64xf32, #tpu.memory_space<vmem>>, %arg3: memref<16x64xf32, #tpu.memory_space<vmem>>, %arg4: memref<8x8xf32, #tpu.memory_space<vmem>>, %arg5: memref<8x8xf32, #tpu.memory_space<vmem>>, %arg6: memref<1x8x8xf32, #tpu.memory_space<vmem>>) attributes {dimension_semantics = [#tpu.dimension_semantics<parallel>], iteration_bounds = array<i64: 2>, scalar_prefetch = 0 : i64, scratch_operands = 0 : i64, tpu.core_type = #tpu.core_type<tc>, window_params = [{transform_indices = @transform_0, window_bounds = array<i64: 1, 64, 8>}, {pipeline_mode = #tpu.pipeline_mode<synchronous>, transform_indices = @transform_1, window_bounds = array<i64: 16, 64>}, {pipeline_mode = #tpu.pipeline_mode<synchronous>, transform_indices = @transform_2, window_bounds = array<i64: 16, 64>}, {pipeline_mode = #tpu.pipeline_mode<synchronous>, transform_indices = @transform_3, window_bounds = array<i64: 8, 8>}, {pipeline_mode = #tpu.pipeline_mode<synchronous>, transform_indices = @transform_4, window_bounds = array<i64: 8, 8>}, {transform_indices = @transform_5, window_bounds = array<i64: 1, 8, 8>}]} {
    %c0 = arith.constant 0 : index
    %c0_0 = arith.constant 0 : index
    %c0_1 = arith.constant 0 : index
    %0 = vector.load %arg1[%c0, %c0_0, %c0_1] : memref<1x64x8xf32, #tpu.memory_space<vmem>>, vector<1x64x8xf32>
    %1 = vector.shape_cast %0 : vector<1x64x8xf32> to vector<64x8xf32>
    %c0_2 = arith.constant 0 : index
    %c0_3 = arith.constant 0 : index
    %2 = vector.load %arg2[%c0_2, %c0_3] : memref<16x64xf32, #tpu.memory_space<vmem>>, vector<16x64xf32>
    %cst = arith.constant dense<0.000000e+00> : vector<16x8xf32>
    %3 = tpu.matmul %2, %1, %cst {dimension_numbers = #tpu.dot_dimension_numbers<[1], [0], [0], [1], [0, 0, 1, 1], [], []>} : vector<16x64xf32>, vector<64x8xf32>, vector<16x8xf32> -> vector<16x8xf32>
    %c0_4 = arith.constant 0 : index
    %c0_5 = arith.constant 0 : index
    %4 = vector.load %arg3[%c0_4, %c0_5] : memref<16x64xf32, #tpu.memory_space<vmem>>, vector<16x64xf32>
    %cst_6 = arith.constant dense<0.000000e+00> : vector<16x8xf32>
    %5 = tpu.matmul %4, %1, %cst_6 {dimension_numbers = #tpu.dot_dimension_numbers<[1], [0], [0], [1], [0, 0, 1, 1], [], []>} : vector<16x64xf32>, vector<64x8xf32>, vector<16x8xf32> -> vector<16x8xf32>
    %cst_7 = arith.constant dense<0.000000e+00> : vector<8x8xf32>
    %6 = tpu.matmul %3, %5, %cst_7 {dimension_numbers = #tpu.dot_dimension_numbers<[0], [0], [1], [1], [0, 1, 1, 1], [], []>} : vector<16x8xf32>, vector<16x8xf32>, vector<8x8xf32> -> vector<8x8xf32>
    %c0_8 = arith.constant 0 : index
    %c0_9 = arith.constant 0 : index
    %7 = vector.load %arg4[%c0_8, %c0_9] : memref<8x8xf32, #tpu.memory_space<vmem>>, vector<8x8xf32>
    %8 = arith.addf %6, %7 : vector<8x8xf32>
    %cst_10 = arith.constant 5.000000e-01 : f32
    %9 = vector.broadcast %cst_10 : f32 to vector<8x8xf32>
    %10 = arith.mulf %9, %8 : vector<8x8xf32>
    %11 = math.tanh %10 : vector<8x8xf32>
    %cst_11 = arith.constant 1.000000e+00 : f32
    %12 = vector.broadcast %cst_11 : f32 to vector<8x8xf32>
    %13 = arith.addf %11, %12 : vector<8x8xf32>
    %cst_12 = arith.constant 5.000000e-01 : f32
    %14 = vector.broadcast %cst_12 : f32 to vector<8x8xf32>
    %15 = arith.mulf %14, %13 : vector<8x8xf32>
    %c0_13 = arith.constant 0 : index
    %c0_14 = arith.constant 0 : index
    %16 = vector.load %arg5[%c0_13, %c0_14] : memref<8x8xf32, #tpu.memory_space<vmem>>, vector<8x8xf32>
    %cst_15 = arith.constant dense<0.000000e+00> : vector<8x8xf32>
    %17 = tpu.matmul %16, %15, %cst_15 {dimension_numbers = #tpu.dot_dimension_numbers<[1], [0], [0], [1], [0, 0, 1, 1], [], []>} : vector<8x8xf32>, vector<8x8xf32>, vector<8x8xf32> -> vector<8x8xf32>
    %cst_16 = arith.constant dense<0xFF800000> : vector<8xf32>
    %18 = vector.multi_reduction <maximumf>, %17, %cst_16 [0] : vector<8x8xf32> to vector<8xf32>
    %19 = vector.shape_cast %18 : vector<8xf32> to vector<1x8xf32>
    %20 = vector.broadcast %19 : vector<1x8xf32> to vector<8x8xf32>
    %21 = arith.subf %17, %20 : vector<8x8xf32>
    %22 = math.exp %21 : vector<8x8xf32>
    %cst_17 = arith.constant dense<0.000000e+00> : vector<8xf32>
    %23 = vector.multi_reduction <add>, %22, %cst_17 [0] : vector<8x8xf32> to vector<8xf32>
    %24 = vector.shape_cast %23 : vector<8xf32> to vector<1x8xf32>
    %25 = tpu.reciprocal %24 {approx = true} : vector<1x8xf32> -> vector<1x8xf32>
    %26 = vector.broadcast %25 : vector<1x8xf32> to vector<8x8xf32>
    %27 = arith.mulf %22, %26 : vector<8x8xf32>
    %c0_18 = arith.constant 0 : index
    %c0_19 = arith.constant 0 : index
    %c0_20 = arith.constant 0 : index
    %28 = vector.load %arg6[%c0_18, %c0_19, %c0_20] : memref<1x8x8xf32, #tpu.memory_space<vmem>>, vector<1x8x8xf32>
    %29 = vector.shape_cast %28 : vector<1x8x8xf32> to vector<8x8xf32>
    %30 = vector.shape_cast %27 : vector<8x8xf32> to vector<1x8x8xf32>
    tpu.vector_store %arg6[%c0_18, %c0_19, %c0_20], %30 {strides = array<i32>} : memref<1x8x8xf32, #tpu.memory_space<vmem>>, vector<1x8x8xf32>,
    return
  }
  func.func @transform_0(%arg0: i32) -> (i32, i32, i32) {
    %c0_i32 = arith.constant 0 : i32
    %c0_i32_0 = arith.constant 0 : i32
    %c0_i32_1 = arith.constant 0 : i32
    return %arg0, %c0_i32, %c0_i32_0 : i32, i32, i32
  }
  func.func @transform_1(%arg0: i32) -> (i32, i32) {
    %c0_i32 = arith.constant 0 : i32
    %c0_i32_0 = arith.constant 0 : i32
    %c0_i32_1 = arith.constant 0 : i32
    return %c0_i32, %c0_i32_0 : i32, i32
  }
  func.func @transform_2(%arg0: i32) -> (i32, i32) {
    %c0_i32 = arith.constant 0 : i32
    %c0_i32_0 = arith.constant 0 : i32
    %c0_i32_1 = arith.constant 0 : i32
    return %c0_i32, %c0_i32_0 : i32, i32
  }
  func.func @transform_3(%arg0: i32) -> (i32, i32) {
    %c0_i32 = arith.constant 0 : i32
    %c0_i32_0 = arith.constant 0 : i32
    %c0_i32_1 = arith.constant 0 : i32
    return %c0_i32, %c0_i32_0 : i32, i32
  }
  func.func @transform_4(%arg0: i32) -> (i32, i32) {
    %c0_i32 = arith.constant 0 : i32
    %c0_i32_0 = arith.constant 0 : i32
    %c0_i32_1 = arith.constant 0 : i32
    return %c0_i32, %c0_i32_0 : i32, i32
  }
  func.func @transform_5(%arg0: i32) -> (i32, i32, i32) {
    %c0_i32 = arith.constant 0 : i32
    %c0_i32_0 = arith.constant 0 : i32
    %c0_i32_1 = arith.constant 0 : i32
    return %arg0, %c0_i32, %c0_i32_0 : i32, i32, i32
  }
}

</mosaic_0001>

<llo_original>
// kernel: tpu_custom_call.1
$region0: #{tpu_custom_call.1}
  #allocation0 [shape = 'u32[]', space=smem, size = 0x4, offset = 0x4, fixed_abs, tag = 'smem constant byte address 0x4 - core index']
  #allocation1 [shape = 'u32[144,128]{1,0:T(1,128)}', space=vmem, size = 0x12000, scoped, tag = 'internal scratch']
  %s0 = inlined_call_operand.vmem [shape: f32[2,64,8], index: 0, kind: input, shape index: {}]
  %s1 = inlined_call_operand.vmem [shape: f32[16,64], index: 1, kind: input, shape index: {}]
  %s2 = inlined_call_operand.vmem [shape: f32[16,64], index: 2, kind: input, shape index: {}]
  %s3 = inlined_call_operand.vmem [shape: f32[8,8], index: 3, kind: input, shape index: {}]
  %s4 = inlined_call_operand.vmem [shape: f32[8,8], index: 4, kind: input, shape index: {}]
  %s5 = inlined_call_operand.hbm [shape: f32[2,8,8], index: 5, kind: output, shape index: {}]
  %s6 = sld [smem:[#allocation0]]
  $region53: #{tpu_custom_call.1} parent=0
    _
  %s8 = ssub.s32 1, %s6
  %s9 = scalar_select 0, %s8, %s6
  $region1: #{tpu_custom_call.1} parent=0
    #allocation2 [shape = 'u8[8192]{0}', space=vmem, size = 0x2000, scoped, tag = 'output window, operand 0']
    #allocation3 [shape = 's32[2]{0}', space=sflag, size = 0x8, scoped, tag = 'scoped memory for tpu_custom_call.1']
    %10 = vsyncpa [#allocation3], 0
    %s11 = scalar_lea.sflag [#allocation3], 1
    %12 = vsyncpa %s11, 0
    loop: start=0, step=1, limit=4
    $region2: #{tpu_custom_call.1} parent=1 // loop_pre_header
      _
    $region3: #{tpu_custom_call.1} parent=1 // loop_header
      %s14 = sphi 0, %s18
      %p15 = scmp.ge.s32.totalorder %s14, 4
      %s24 = sphi 0, %s26
      %s27 = sphi 0, %s24
      %s28 = sphi 0, %s27
      %s44 = sphi 0, %s28
      %s48 = sphi 0, %s48
      %s50 = sphi 0, %s48
      %s51 = sphi 0, %s50
      %s65 = sphi 0, %s51
      %s69 = sphi 0, %s69
      %s71 = sphi 0, %s69
      %s72 = sphi 0, %s71
      %s86 = sphi 0, %s72
      %s90 = sphi 0, %s90
      %s92 = sphi 0, %s90
      %s93 = sphi 0, %s92
      %s107 = sphi 0, %s93
      %s111 = sphi 0, %s111
      %s113 = sphi 0, %s111
      %s114 = sphi 0, %s113
      %s128 = sphi 0, %s114
      %s134 = sphi 0, %s136
      %s137 = sphi 0, %s134
      %s138 = sphi 0, %s137
      %s154 = sphi 0, %s138
    $region4: #{tpu_custom_call.1} parent=1 // loop_header_branch
      %17 = sbr.rel (%p15) target = $region8
    $region5: #{tpu_custom_call.1} parent=1 // loop_body
      %s19 = ssub.s32 %s14, 1
      %s20 = ssub.s32 %s14, 2
      %s21 = sadd.s32 %s14, 1
      %s22 = ssub.s32 %s14, %s21
      %p23 = scmp.eq.s32.totalorder %s22, 0
      %s25 = sadd.s32 %s24, 1
      %s26 = scalar_select %p23, %s24, %s25
      %p29 = pneg %p23
      %p30 = scmp.eq.s32.totalorder %s14, 1
      %p31 = por %p29, %p30
      %p32 = scmp.ne.s32.totalorder %s24, %s27
      %p33 = scmp.eq.s32.totalorder %s14, 0
      %p34 = por %p32, %p33
      %p35 = scmp.ne.s32.totalorder %s24, %s27
      %p36 = scmp.eq.s32.totalorder %s19, 1
      %p37 = por %p35, %p36
      %p38 = scmp.ne.s32.totalorder %s27, %s28
      %p39 = scmp.eq.s32.totalorder %s19, 0
      %p40 = por %p38, %p39
      %p41 = scmp.ne.s32.totalorder %s27, %s28
      %p42 = scmp.eq.s32.totalorder %s20, 1
      %p43 = por %p41, %p42
      %p45 = scmp.ne.s32.totalorder %s28, %s44
      %p46 = scmp.eq.s32.totalorder %s20, 0
      %p47 = por %p45, %p46
      %s49 = sadd.s32 %s48, 1
      %p52 = scmp.eq.s32.totalorder %s14, 1
      %p53 = scmp.ne.s32.totalorder %s48, %s50
      %p54 = scmp.eq.s32.totalorder %s14, 0
      %p55 = por %p53, %p54
      %p56 = scmp.ne.s32.totalorder %s48, %s50
      %p57 = scmp.eq.s32.totalorder %s19, 1
      %p58 = por %p56, %p57
      %p59 = scmp.ne.s32.totalorder %s50, %s51
      %p60 = scmp.eq.s32.totalorder %s19, 0
      %p61 = por %p59, %p60
      %p62 = scmp.ne.s32.totalorder %s50, %s51
      %p63 = scmp.eq.s32.totalorder %s20, 1
      %p64 = por %p62, %p63
      %p66 = scmp.ne.s32.totalorder %s51, %s65
      %p67 = scmp.eq.s32.totalorder %s20, 0
      %p68 = por %p66, %p67
      %s70 = sadd.s32 %s69, 1
      %p73 = scmp.eq.s32.totalorder %s14, 1
      %p74 = scmp.ne.s32.totalorder %s69, %s71
      %p75 = scmp.eq.s32.totalorder %s14, 0
      %p76 = por %p74, %p75
      %p77 = scmp.ne.s32.totalorder %s69, %s71
      %p78 = scmp.eq.s32.totalorder %s19, 1
      %p79 = por %p77, %p78
      %p80 = scmp.ne.s32.totalorder %s71, %s72
      %p81 = scmp.eq.s32.totalorder %s19, 0
      %p82 = por %p80, %p81
      %p83 = scmp.ne.s32.totalorder %s71, %s72
      %p84 = scmp.eq.s32.totalorder %s20, 1
      %p85 = por %p83, %p84
      %p87 = scmp.ne.s32.totalorder %s72, %s86
      %p88 = scmp.eq.s32.totalorder %s20, 0
      %p89 = por %p87, %p88
      %s91 = sadd.s32 %s90, 1
      %p94 = scmp.eq.s32.totalorder %s14, 1
      %p95 = scmp.ne.s32.totalorder %s90, %s92
      %p96 = scmp.eq.s32.totalorder %s14, 0
      %p97 = por %p95, %p96
      %p98 = scmp.ne.s32.totalorder %s90, %s92
      %p99 = scmp.eq.s32.totalorder %s19, 1
      %p100 = por %p98, %p99
      %p101 = scmp.ne.s32.totalorder %s92, %s93
      %p102 = scmp.eq.s32.totalorder %s19, 0
      %p103 = por %p101, %p102
      %p104 = scmp.ne.s32.totalorder %s92, %s93
      %p105 = scmp.eq.s32.totalorder %s20, 1
      %p106 = por %p104, %p105
      %p108 = scmp.ne.s32.totalorder %s93, %s107
      %p109 = scmp.eq.s32.totalorder %s20, 0
      %p110 = por %p108, %p109
      %s112 = sadd.s32 %s111, 1
      %p115 = scmp.eq.s32.totalorder %s14, 1
      %p116 = scmp.ne.s32.totalorder %s111, %s113
      %p117 = scmp.eq.s32.totalorder %s14, 0
      %p118 = por %p116, %p117
      %p119 = scmp.ne.s32.totalorder %s111, %s113
      %p120 = scmp.eq.s32.totalorder %s19, 1
      %p121 = por %p119, %p120
      %p122 = scmp.ne.s32.totalorder %s113, %s114
      %p123 = scmp.eq.s32.totalorder %s19, 0
      %p124 = por %p122, %p123
      %p125 = scmp.ne.s32.totalorder %s113, %s114
      %p126 = scmp.eq.s32.totalorder %s20, 1
      %p127 = por %p125, %p126
      %p129 = scmp.ne.s32.totalorder %s114, %s128
      %p130 = scmp.eq.s32.totalorder %s20, 0
      %p131 = por %p129, %p130
      %s132 = ssub.s32 %s14, %s21
      %p133 = scmp.eq.s32.totalorder %s132, 0
      %s135 = sadd.s32 %s134, 1
      %s136 = scalar_select %p133, %s134, %s135
      %p139 = pneg %p133
      %p140 = scmp.eq.s32.totalorder %s14, 1
      %p141 = por %p139, %p140
      %p142 = scmp.ne.s32.totalorder %s134, %s137
      %p143 = scmp.eq.s32.totalorder %s14, 0
      %p144 = por %p142, %p143
      %p145 = scmp.ne.s32.totalorder %s134, %s137
      %p146 = scmp.eq.s32.totalorder %s19, 1
      %p147 = por %p145, %p146
      %p148 = scmp.ne.s32.totalorder %s137, %s138
      %p149 = scmp.eq.s32.totalorder %s19, 0
      %p150 = por %p148, %p149
      %p151 = scmp.ne.s32.totalorder %s137, %s138
      %p152 = scmp.eq.s32.totalorder %s20, 1
      %p153 = por %p151, %p152
      %p155 = scmp.ne.s32.totalorder %s138, %s154
      %p156 = scmp.eq.s32.totalorder %s20, 0
      %p157 = por %p155, %p156
      %p158 = scmp.le.s32.totalorder 1, %s14
      %p159 = scmp.lt.s32.totalorder %s14, 3
      %p160 = pnand %p158, %p159
      %p161 = pneg %p160
      // Predicated region
      $region9: #{tpu_custom_call.1} parent=5 // pred_check
        _
      $region10: #{tpu_custom_call.1} parent=5 // pred_check_branch
        %163 = sbr.rel (%p160) target = $region12
      $region11: #{tpu_custom_call.1} parent=5 // pred_region
        %s164 = ssub.s32 %s14, 1
        // Predicated region
        $region13: #{tpu_custom_call.1} parent=11 // pred_check
          %p165 = pneg %p61
        $region14: #{tpu_custom_call.1} parent=11 // pred_check_branch
          %167 = sbr.rel (%p165) target = $region16
        $region15: #{tpu_custom_call.1} parent=11 // pred_region
          _
        $region16: #{tpu_custom_call.1} parent=11 // pred_fallthru
          _
        // Predicated region
        $region17: #{tpu_custom_call.1} parent=11 // pred_check
          %p168 = pneg %p82
        $region18: #{tpu_custom_call.1} parent=11 // pred_check_branch
          %170 = sbr.rel (%p168) target = $region20
        $region19: #{tpu_custom_call.1} parent=11 // pred_region
          _
        $region20: #{tpu_custom_call.1} parent=11 // pred_fallthru
          _
        // Predicated region
        $region21: #{tpu_custom_call.1} parent=11 // pred_check
          %p171 = pneg %p103
        $region22: #{tpu_custom_call.1} parent=11 // pred_check_branch
          %173 = sbr.rel (%p171) target = $region24
        $region23: #{tpu_custom_call.1} parent=11 // pred_region
          _
        $region24: #{tpu_custom_call.1} parent=11 // pred_fallthru
          _
        // Predicated region
        $region25: #{tpu_custom_call.1} parent=11 // pred_check
          %p174 = pneg %p124
        $region26: #{tpu_custom_call.1} parent=11 // pred_check_branch
          %176 = sbr.rel (%p174) target = $region28
        $region27: #{tpu_custom_call.1} parent=11 // pred_region
          _
        $region28: #{tpu_custom_call.1} parent=11 // pred_fallthru
          _
      $region12: #{tpu_custom_call.1} parent=5 // pred_fallthru
        _
      %p177 = scmp.lt.s32.totalorder %s14, 2
      // Predicated region
      $region29: #{tpu_custom_call.1} parent=5 // pred_check
        %p178 = pneg %p177
      $region30: #{tpu_custom_call.1} parent=5 // pred_check_branch
        %180 = sbr.rel (%p178) target = $region32
      $region31: #{tpu_custom_call.1} parent=5 // pred_region
        // Predicated region
        $region33: #{tpu_custom_call.1} parent=31 // pred_check
          %p181 = pneg %p34
        $region34: #{tpu_custom_call.1} parent=31 // pred_check_branch
          %183 = sbr.rel (%p181) target = $region36
        $region35: #{tpu_custom_call.1} parent=31 // pred_region
          %p184 = scmp.lt.s32.totalorder %s14, 1
          %s185 = scalar_select %p184, %s14, 1
          %s186 = smul.addr %s185, 8
          %s187 = smul.addr %s186, 8
          %s188 = scalar_lea.vmem %s0, %s187
        $region36: #{tpu_custom_call.1} parent=31 // pred_fallthru
          _
      $region32: #{tpu_custom_call.1} parent=5 // pred_fallthru
        _
      %p189 = scmp.le.s32.totalorder 1, %s14
      %p190 = scmp.lt.s32.totalorder %s14, 3
      %p191 = pnand %p189, %p190
      %p192 = pneg %p191
      // Predicated region
      $region37: #{tpu_custom_call.1} parent=5 // pred_check
        _
      $region38: #{tpu_custom_call.1} parent=5 // pred_check_branch
        %194 = sbr.rel (%p191) target = $region40
      $region39: #{tpu_custom_call.1} parent=5 // pred_region
        %s195 = ssub.s32 %s14, 1
        %p196 = scmp.lt.s32.totalorder %s19, 1
        %s197 = scalar_select %p196, %s19, 1
        %s198 = smul.addr %s197, 8
        %s199 = smul.addr %s198, 8
        %s200 = scalar_lea.vmem %s0, %s199
        %p201 = pneg %p40
        %p202 = pneg %p37
        %p203 = pneg %p61
        %p204 = pneg %p58
        %p205 = pneg %p82
        %p206 = pneg %p79
        %p207 = pneg %p103
        %p208 = pneg %p100
        %p209 = pneg %p124
        %p210 = pneg %p121
        %p211 = pneg %p150
        %p212 = pneg %p147
        %s213 = sand.u32 %s137, 1
        %s214 = scalar_lea.sflag [#allocation3], %s213
        %s215 = sand.u32 %s137, 1
        %s216 = smul.addr %s215, 8
        %s217 = scalar_lea.vmem [#allocation2], %s216
        %p218 = scmp.lt.s32.totalorder %s19, 1
        %s219 = scalar_select %p218, %s19, 1
        %s220 = smul.addr %s219, 8
        %s221 = smul.addr %s220, 8
        %s222 = scalar_lea.vmem %s0, %s221
        %v223 = vld [vmem:[%s222] sm:$0xff]
        %v224 = vld [vmem:[%s222 + $0x8] sm:$0xff]
        %v225 = vld [vmem:[%s222 + $0x10] sm:$0xff]
        %v226 = vld [vmem:[%s222 + $0x18] sm:$0xff]
        %v227 = vld [vmem:[%s222 + $0x20] sm:$0xff]
        %v228 = vld [vmem:[%s222 + $0x28] sm:$0xff]
        %v229 = vld [vmem:[%s222 + $0x30] sm:$0xff]
        %v230 = vld [vmem:[%s222 + $0x38] sm:$0xff]
        %v231 = vld [vmem:[%s1] sm:$0xff]
        %v232 = vld [vmem:[%s1 + $0x8] sm:$0xff]
        %vm233 = vcmask 523264
        %v235 = vsel %vm233, %v231, 0
        %v238 = vsel %vm233, %v232, 0
        %240 = vmatprep.subr.mxu0 0.0
        %241 = vmatpush1.msra.mxu0 0.0
        %242 = vmatprep.subr.mxu0 0.0
        %243 = vmatpush1.msra.mxu0 0.0
        %244 = vmatprep.subr.mxu0 0.0
        %245 = vmatpush1.msra.mxu0 0.0
        %246 = vmatprep.subr.mxu0 0.0
        %247 = vmatpush1.msra.mxu0 0.0
        %248 = vmatprep.subr.mxu0 0.0
        %249 = vmatpush1.msra.mxu0 0.0
        %250 = vmatprep.subr.mxu0 0.0
        %251 = vmatpush1.msra.mxu0 0.0
        %252 = vmatprep.subr.mxu0 0.0
        %253 = vmatpush1.msra.mxu0 0.0
        %254 = vmatprep.subr.mxu0 0.0
        %255 = vmatpush1.msra.mxu0 0.0
        %256 = vmatprep.subr.mxu0 0.0
        %257 = vmatpush1.msra.mxu0 %v230
        %258 = vmatprep.subr.mxu0 0.0
        %259 = vmatpush1.msra.mxu0 %v229
        %260 = vmatprep.subr.mxu0 0.0
        %261 = vmatpush1.msra.mxu0 %v228
        %262 = vmatprep.subr.mxu0 0.0
        %263 = vmatpush1.msra.mxu0 %v227
        %264 = vmatprep.subr.mxu0 0.0
        %265 = vmatpush1.msra.mxu0 %v226
        %266 = vmatprep.subr.mxu0 0.0
        %267 = vmatpush1.msra.mxu0 %v225
        %268 = vmatprep.subr.mxu0 0.0
        %269 = vmatpush1.msra.mxu0 %v224
        %270 = vmatprep.subr.mxu0 0.0
        %271 = vmatpush1.msra.mxu0 %v223
        %272 = vmatprep.subr.mxu0 0.0
        %273 = vmatpush2.msra.mxu0 0.0
        %274 = vmatprep.subr.mxu0 0.0
        %275 = vmatpush2.msra.mxu0 0.0
        %276 = vmatprep.subr.mxu0 0.0
        %277 = vmatpush2.msra.mxu0 0.0
        %278 = vmatprep.subr.mxu0 0.0
        %279 = vmatpush2.msra.mxu0 0.0
        %280 = vmatprep.subr.mxu0 0.0
        %281 = vmatpush2.msra.mxu0 0.0
        %282 = vmatprep.subr.mxu0 0.0
        %283 = vmatpush2.msra.mxu0 0.0
        %284 = vmatprep.subr.mxu0 0.0
        %285 = vmatpush2.msra.mxu0 0.0
        %286 = vmatprep.subr.mxu0 0.0
        %287 = vmatpush2.msra.mxu0 0.0
        %288 = vmatprep.subr.mxu0 0.0
        %289 = vmatpush2.msra.mxu0 0.0
        %290 = vmatprep.subr.mxu0 0.0
        %291 = vmatpush2.msra.mxu0 0.0
        %292 = vmatprep.subr.mxu0 0.0
        %293 = vmatpush2.msra.mxu0 0.0
        %294 = vmatprep.subr.mxu0 0.0
        %295 = vmatpush2.msra.mxu0 0.0
        %296 = vmatprep.subr.mxu0 0.0
        %297 = vmatpush2.msra.mxu0 0.0
        %298 = vmatprep.subr.mxu0 0.0
        %299 = vmatpush2.msra.mxu0 0.0
        %300 = vmatprep.subr.mxu0 0.0
        %301 = vmatpush2.msra.mxu0 0.0
        %302 = vmatprep.subr.mxu0 0.0
        %303 = vmatpush2.msra.mxu0 0.0
        %304 = vmatprep.mubr.f32.mxu0 0.0
        %305 = vmatmul.mubr.f32.gmra.mxu0 %v235
        %v306 = vpop.f32.mrf.mxu0
        %v307 = vadd.f32 0.0, %v306
        %v308 = vpop.f32.mrf.mxu0
        %309 = vmatprep.mubr.f32.mxu0 0.0
        %310 = vmatmul.mubr.f32.gmra.mxu0 %v238
        %v311 = vpop.f32.mrf.mxu0
        %v312 = vadd.f32 0.0, %v311
        %v313 = vpop.f32.mrf.mxu0
        %314 = vdwg.mxu0
        %v315 = vld [vmem:[%s2] sm:$0xff]
        %v316 = vld [vmem:[%s2 + $0x8] sm:$0xff]
        %v318 = vsel %vm233, %v315, 0
        %v321 = vsel %vm233, %v316, 0
        %323 = vmatprep.subr.mxu0 0.0
        %324 = vmatpush1.msra.mxu0 0.0
        %325 = vmatprep.subr.mxu0 0.0
        %326 = vmatpush1.msra.mxu0 0.0
        %327 = vmatprep.subr.mxu0 0.0
        %328 = vmatpush1.msra.mxu0 0.0
        %329 = vmatprep.subr.mxu0 0.0
        %330 = vmatpush1.msra.mxu0 0.0
        %331 = vmatprep.subr.mxu0 0.0
        %332 = vmatpush1.msra.mxu0 0.0
        %333 = vmatprep.subr.mxu0 0.0
        %334 = vmatpush1.msra.mxu0 0.0
        %335 = vmatprep.subr.mxu0 0.0
        %336 = vmatpush1.msra.mxu0 0.0
        %337 = vmatprep.subr.mxu0 0.0
        %338 = vmatpush1.msra.mxu0 0.0
        %339 = vmatprep.subr.mxu0 0.0
        %340 = vmatpush1.msra.mxu0 %v230
        %341 = vmatprep.subr.mxu0 0.0
        %342 = vmatpush1.msra.mxu0 %v229
        %343 = vmatprep.subr.mxu0 0.0
        %344 = vmatpush1.msra.mxu0 %v228
        %345 = vmatprep.subr.mxu0 0.0
        %346 = vmatpush1.msra.mxu0 %v227
        %347 = vmatprep.subr.mxu0 0.0
        %348 = vmatpush1.msra.mxu0 %v226
        %349 = vmatprep.subr.mxu0 0.0
        %350 = vmatpush1.msra.mxu0 %v225
        %351 = vmatprep.subr.mxu0 0.0
        %352 = vmatpush1.msra.mxu0 %v224
        %353 = vmatprep.subr.mxu0 0.0
        %354 = vmatpush1.msra.mxu0 %v223
        %355 = vmatprep.subr.mxu0 0.0
        %356 = vmatpush2.msra.mxu0 0.0
        %357 = vmatprep.subr.mxu0 0.0
        %358 = vmatpush2.msra.mxu0 0.0
        %359 = vmatprep.subr.mxu0 0.0
        %360 = vmatpush2.msra.mxu0 0.0
        %361 = vmatprep.subr.mxu0 0.0
        %362 = vmatpush2.msra.mxu0 0.0
        %363 = vmatprep.subr.mxu0 0.0
        %364 = vmatpush2.msra.mxu0 0.0
        %365 = vmatprep.subr.mxu0 0.0
        %366 = vmatpush2.msra.mxu0 0.0
        %367 = vmatprep.subr.mxu0 0.0
        %368 = vmatpush2.msra.mxu0 0.0
        %369 = vmatprep.subr.mxu0 0.0
        %370 = vmatpush2.msra.mxu0 0.0
        %371 = vmatprep.subr.mxu0 0.0
        %372 = vmatpush2.msra.mxu0 0.0
        %373 = vmatprep.subr.mxu0 0.0
        %374 = vmatpush2.msra.mxu0 0.0
        %375 = vmatprep.subr.mxu0 0.0
        %376 = vmatpush2.msra.mxu0 0.0
        %377 = vmatprep.subr.mxu0 0.0
        %378 = vmatpush2.msra.mxu0 0.0
        %379 = vmatprep.subr.mxu0 0.0
        %380 = vmatpush2.msra.mxu0 0.0
        %381 = vmatprep.subr.mxu0 0.0
        %382 = vmatpush2.msra.mxu0 0.0
        %383 = vmatprep.subr.mxu0 0.0
        %384 = vmatpush2.msra.mxu0 0.0
        %385 = vmatprep.subr.mxu0 0.0
        %386 = vmatpush2.msra.mxu0 0.0
        %387 = vmatprep.mubr.f32.mxu0 0.0
        %388 = vmatmul.mubr.f32.gmra.mxu0 %v318
        %v389 = vpop.f32.mrf.mxu0
        %v390 = vadd.f32 0.0, %v389
        %v391 = vpop.f32.mrf.mxu0
        %392 = vmatprep.mubr.f32.mxu0 0.0
        %393 = vmatmul.mubr.f32.gmra.mxu0 %v321
        %v394 = vpop.f32.mrf.mxu0
        %v395 = vadd.f32 0.0, %v394
        %v396 = vpop.f32.mrf.mxu0
        %397 = vdwg.mxu0
        %v398 = vld [vmem:[%s3] sm:$0xff]
        %399 = vxpose.xlu0.b32.start [1/16] %v307, 128
        %400 = vxpose.xlu0.b32.cont [2/16] %v312, 128
        %401 = vxpose.xlu0.b32.cont [3/16] 0.0, 128
        %402 = vxpose.xlu0.b32.cont [4/16] 0.0, 128
        %403 = vxpose.xlu0.b32.cont [5/16] 0.0, 128
        %404 = vxpose.xlu0.b32.cont [6/16] 0.0, 128
        %405 = vxpose.xlu0.b32.cont [7/16] 0.0, 128
        %406 = vxpose.xlu0.b32.cont [8/16] 0.0, 128
        %407 = vxpose.xlu0.b32.cont [9/16] 0.0, 128
        %408 = vxpose.xlu0.b32.cont [10/16] 0.0, 128
        %409 = vxpose.xlu0.b32.cont [11/16] 0.0, 128
        %410 = vxpose.xlu0.b32.cont [12/16] 0.0, 128
        %411 = vxpose.xlu0.b32.cont [13/16] 0.0, 128
        %412 = vxpose.xlu0.b32.cont [14/16] 0.0, 128
        %413 = vxpose.xlu0.b32.cont [15/16] 0.0, 128
        %414 = vxpose.xlu0.b32.end [16/16] 0.0, 128
        %v415 = vpop.trf.xlu0
        %v416 = vpop.trf.xlu0
        %v417 = vpop.trf.xlu0
        %v418 = vpop.trf.xlu0
        %v419 = vpop.trf.xlu0
        %v420 = vpop.trf.xlu0
        %v421 = vpop.trf.xlu0
        %v422 = vpop.trf.xlu0
        %v423 = vpop.trf.xlu0
        %v424 = vpop.trf.xlu0
        %v425 = vpop.trf.xlu0
        %v426 = vpop.trf.xlu0
        %v427 = vpop.trf.xlu0
        %v428 = vpop.trf.xlu0
        %v429 = vpop.trf.xlu0
        %v430 = vpop.trf.xlu0
        %vm431 = vcmask 130048
        %v433 = vsel %vm431, %v415, 0
        %435 = vmatprep.subr.mxu0 0.0
        %436 = vmatpush1.msra.mxu0 0.0
        %437 = vmatprep.subr.mxu0 0.0
        %438 = vmatpush1.msra.mxu0 0.0
        %439 = vmatprep.subr.mxu0 0.0
        %440 = vmatpush1.msra.mxu0 0.0
        %441 = vmatprep.subr.mxu0 0.0
        %442 = vmatpush1.msra.mxu0 0.0
        %443 = vmatprep.subr.mxu0 0.0
        %444 = vmatpush1.msra.mxu0 0.0
        %445 = vmatprep.subr.mxu0 0.0
        %446 = vmatpush1.msra.mxu0 0.0
        %447 = vmatprep.subr.mxu0 0.0
        %448 = vmatpush1.msra.mxu0 0.0
        %449 = vmatprep.subr.mxu0 0.0
        %450 = vmatpush1.msra.mxu0 0.0
        %451 = vmatprep.subr.mxu0 0.0
        %452 = vmatpush1.msra.mxu0 0.0
        %453 = vmatprep.subr.mxu0 0.0
        %454 = vmatpush1.msra.mxu0 0.0
        %455 = vmatprep.subr.mxu0 0.0
        %456 = vmatpush1.msra.mxu0 0.0
        %457 = vmatprep.subr.mxu0 0.0
        %458 = vmatpush1.msra.mxu0 0.0
        %459 = vmatprep.subr.mxu0 0.0
        %460 = vmatpush1.msra.mxu0 0.0
        %461 = vmatprep.subr.mxu0 0.0
        %462 = vmatpush1.msra.mxu0 0.0
        %463 = vmatprep.subr.mxu0 0.0
        %464 = vmatpush1.msra.mxu0 %v395
        %465 = vmatprep.subr.mxu0 0.0
        %466 = vmatpush1.msra.mxu0 %v390
        %467 = vmatprep.subr.mxu0 0.0
        %468 = vmatpush2.msra.mxu0 0.0
        %469 = vmatprep.subr.mxu0 0.0
        %470 = vmatpush2.msra.mxu0 0.0
        %471 = vmatprep.subr.mxu0 0.0
        %472 = vmatpush2.msra.mxu0 0.0
        %473 = vmatprep.subr.mxu0 0.0
        %474 = vmatpush2.msra.mxu0 0.0
        %475 = vmatprep.subr.mxu0 0.0
        %476 = vmatpush2.msra.mxu0 0.0
        %477 = vmatprep.subr.mxu0 0.0
        %478 = vmatpush2.msra.mxu0 0.0
        %479 = vmatprep.subr.mxu0 0.0
        %480 = vmatpush2.msra.mxu0 0.0
        %481 = vmatprep.subr.mxu0 0.0
        %482 = vmatpush2.msra.mxu0 0.0
        %483 = vmatprep.subr.mxu0 0.0
        %484 = vmatpush2.msra.mxu0 0.0
        %485 = vmatprep.subr.mxu0 0.0
        %486 = vmatpush2.msra.mxu0 0.0
        %487 = vmatprep.subr.mxu0 0.0
        %488 = vmatpush2.msra.mxu0 0.0
        %489 = vmatprep.subr.mxu0 0.0
        %490 = vmatpush2.msra.mxu0 0.0
        %491 = vmatprep.subr.mxu0 0.0
        %492 = vmatpush2.msra.mxu0 0.0
        %493 = vmatprep.subr.mxu0 0.0
        %494 = vmatpush2.msra.mxu0 0.0
        %495 = vmatprep.subr.mxu0 0.0
        %496 = vmatpush2.msra.mxu0 0.0
        %497 = vmatprep.subr.mxu0 0.0
        %498 = vmatpush2.msra.mxu0 0.0
        %499 = vmatprep.mubr.f32.mxu0 0.0
        %500 = vmatmul.mubr.f32.gmra.mxu0 %v433
        %v501 = vpop.f32.mrf.mxu0
        %v502 = vadd.f32 %v398, %v501
        %v503 = vpop.f32.mrf.mxu0
        %504 = vdwg.mxu0
        %v505 = vmul.f32 %v502, 0.5
        %v506 = vtanh.pop %v505
        %v507 = vadd.f32 %v506, 1.0
        %v508 = vmul.f32 %v507, 0.5
        %v509 = vld [vmem:[%s4] sm:$0xff]
        %vm510 = vcmask 64512
        %v512 = vsel %vm510, %v509, 0
        %514 = vmatprep.subr.mxu0 0.0
        %515 = vmatpush1.msra.mxu0 0.0
        %516 = vmatprep.subr.mxu0 0.0
        %517 = vmatpush1.msra.mxu0 0.0
        %518 = vmatprep.subr.mxu0 0.0
        %519 = vmatpush1.msra.mxu0 0.0
        %520 = vmatprep.subr.mxu0 0.0
        %521 = vmatpush1.msra.mxu0 0.0
        %522 = vmatprep.subr.mxu0 0.0
        %523 = vmatpush1.msra.mxu0 0.0
        %524 = vmatprep.subr.mxu0 0.0
        %525 = vmatpush1.msra.mxu0 0.0
        %526 = vmatprep.subr.mxu0 0.0
        %527 = vmatpush1.msra.mxu0 0.0
        %528 = vmatprep.subr.mxu0 0.0
        %529 = vmatpush1.msra.mxu0 0.0
        %530 = vmatprep.subr.mxu0 0.0
        %531 = vmatpush1.msra.mxu0 0.0
        %532 = vmatprep.subr.mxu0 0.0
        %533 = vmatpush1.msra.mxu0 0.0
        %534 = vmatprep.subr.mxu0 0.0
        %535 = vmatpush1.msra.mxu0 0.0
        %536 = vmatprep.subr.mxu0 0.0
        %537 = vmatpush1.msra.mxu0 0.0
        %538 = vmatprep.subr.mxu0 0.0
        %539 = vmatpush1.msra.mxu0 0.0
        %540 = vmatprep.subr.mxu0 0.0
        %541 = vmatpush1.msra.mxu0 0.0
        %542 = vmatprep.subr.mxu0 0.0
        %543 = vmatpush1.msra.mxu0 0.0
        %544 = vmatprep.subr.mxu0 0.0
        %545 = vmatpush1.msra.mxu0 %v508
        %546 = vmatprep.subr.mxu0 0.0
        %547 = vmatpush2.msra.mxu0 0.0
        %548 = vmatprep.subr.mxu0 0.0
        %549 = vmatpush2.msra.mxu0 0.0
        %550 = vmatprep.subr.mxu0 0.0
        %551 = vmatpush2.msra.mxu0 0.0
        %552 = vmatprep.subr.mxu0 0.0
        %553 = vmatpush2.msra.mxu0 0.0
        %554 = vmatprep.subr.mxu0 0.0
        %555 = vmatpush2.msra.mxu0 0.0
        %556 = vmatprep.subr.mxu0 0.0
        %557 = vmatpush2.msra.mxu0 0.0
        %558 = vmatprep.subr.mxu0 0.0
        %559 = vmatpush2.msra.mxu0 0.0
        %560 = vmatprep.subr.mxu0 0.0
        %561 = vmatpush2.msra.mxu0 0.0
        %562 = vmatprep.subr.mxu0 0.0
        %563 = vmatpush2.msra.mxu0 0.0
        %564 = vmatprep.subr.mxu0 0.0
        %565 = vmatpush2.msra.mxu0 0.0
        %566 = vmatprep.subr.mxu0 0.0
        %567 = vmatpush2.msra.mxu0 0.0
        %568 = vmatprep.subr.mxu0 0.0
        %569 = vmatpush2.msra.mxu0 0.0
        %570 = vmatprep.subr.mxu0 0.0
        %571 = vmatpush2.msra.mxu0 0.0
        %572 = vmatprep.subr.mxu0 0.0
        %573 = vmatpush2.msra.mxu0 0.0
        %574 = vmatprep.subr.mxu0 0.0
        %575 = vmatpush2.msra.mxu0 0.0
        %576 = vmatprep.subr.mxu0 0.0
        %577 = vmatpush2.msra.mxu0 0.0
        %578 = vmatprep.mubr.f32.mxu0 0.0
        %579 = vmatmul.mubr.f32.gmra.mxu0 %v512
        %v580 = vpop.f32.mrf.mxu0
        %v581 = vadd.f32 0.0, %v580
        %v582 = vpop.f32.mrf.mxu0
        %583 = vdwg.mxu0
        %v584 = vsel %vm510, %v581, -inf
        %v585 = vrot.slane %v584, 4
        %v586 = vmax.f32 %v584, %v585
        %v587 = vrot.slane %v586, 2
        %v588 = vmax.f32 %v586, %v587
        %v589 = vrot.slane %v588, 1
        %v590 = vmax.f32 %v588, %v589
        %v591 = vsub.f32 %v581, %v590
        %v592 = vmul.f32 %v591, 1.442695
        %v593 = vpow.pop %v592
        %v594 = vsel %vm510, %v593, 0.0
        %v595 = vrot.slane %v594, 4
        %v596 = vadd.f32 %v594, %v595
        %v597 = vrot.slane %v596, 2
        %v598 = vadd.f32 %v596, %v597
        %v599 = vrot.slane %v598, 1
        %v600 = vadd.f32 %v598, %v599
        %v601 = vrcp.pop %v600
        %v602 = vmul.f32 %v593, %v601
        %603 = vst.msk [vmem:[%s217] sm:$0xff] %vm510, %v602
        %s604 = sand.u32 %s137, 1
        %s605 = scalar_lea.sflag [#allocation3], %s604
        %s606 = sand.u32 %s137, 1
        %s607 = smul.addr %s606, 8
        %s608 = scalar_lea.vmem [#allocation2], %s607
        // Predicated region
        $region41: #{tpu_custom_call.1} parent=39 // pred_check
          %p609 = pneg %p147
        $region42: #{tpu_custom_call.1} parent=39 // pred_check_branch
          %611 = sbr.rel (%p609) target = $region44
        $region43: #{tpu_custom_call.1} parent=39 // pred_region
          %s613 = ssub.s32 128, 128
          %614 = vsyncadd %s605, %s613
          %s615 = smul.addr %s19, 128
          %s616 = scalar_lea.hbm %s5, %s615
          %s618 = sshll.u32 %s608, 4
          %s619 = int_to_ptr.vmem [resolvable:$true] %s618
          %621 = dma.vmem_to_hbm [thread:$0]  %s619, 128, %s616, %s605
        $region44: #{tpu_custom_call.1} parent=39 // pred_fallthru
          _
      $region40: #{tpu_custom_call.1} parent=5 // pred_fallthru
        _
      %p622 = scmp.le.s32.totalorder 2, %s14
      // Predicated region
      $region45: #{tpu_custom_call.1} parent=5 // pred_check
        %p623 = pneg %p622
      $region46: #{tpu_custom_call.1} parent=5 // pred_check_branch
        %625 = sbr.rel (%p623) target = $region48
      $region47: #{tpu_custom_call.1} parent=5 // pred_region
        %s626 = ssub.s32 %s14, 2
        // Predicated region
        $region49: #{tpu_custom_call.1} parent=47 // pred_check
          %p627 = pneg %p153
        $region50: #{tpu_custom_call.1} parent=47 // pred_check_branch
          %629 = sbr.rel (%p627) target = $region52
        $region51: #{tpu_custom_call.1} parent=47 // pred_region
          %s630 = sand.u32 %s138, 1
          %s631 = scalar_lea.sflag [#allocation3], %s630
          %s632 = sand.u32 %s138, 1
          %s633 = smul.addr %s632, 8
          %s634 = scalar_lea.vmem [#allocation2], %s633
          %635 = dma.done %s631, 128
        $region52: #{tpu_custom_call.1} parent=47 // pred_fallthru
          _
      $region48: #{tpu_custom_call.1} parent=5 // pred_fallthru
        _
    $region6: #{tpu_custom_call.1} parent=1 // loop_footer
      %s18 = sadd.s32 1, %s14
    $region7: #{tpu_custom_call.1} parent=1 // loop_footer_branch
      %13 = sbr.rel target = $region3
    $region8: #{tpu_custom_call.1} parent=1 // loop_exit
      _
    %636 = vsyncpa [#allocation3], 1
    %s637 = scalar_lea.sflag [#allocation3], 1
    %638 = vsyncpa %s637, 1

</llo_original>
